<compile_context>
chip_gen: v7x
topology: tpu7x:2x2x1
jax: 0.10.0
libtpu: 0.0.40
codegen_flags: <defaults>
</compile_context>

<pallas_src>
import jax
import jax.numpy as jnp
from jax.experimental import pallas as pl
from jax.experimental.pallas import tpu as pltpu


def attention_kernel(emb_ref, w_ref, out_ref):
    # emb_ref: (G, N, F) block of G graphs, w_ref: (F, F), out_ref: (G, F)
    emb = emb_ref[...].astype(jnp.float32)            # accepts bf16 input too
    w = w_ref[...].astype(jnp.float32)

    # global_context = mean_n(emb @ W) == mean_n(emb) @ W   (linearity)
    inv_n = jnp.float32(1.0 / emb.shape[1])
    mean_emb = jnp.sum(emb, axis=1) * inv_n           # (G, F)  sublane reduce (XLU)
    global_context = jnp.dot(mean_emb, w,
                             preferred_element_type=jnp.float32)   # (G, F)  MXU
    transformed_global = jnp.tanh(global_context)     # (G, F)  EUP

    # sigmoid_scores: VPU mul + XLU lane-reduce instead of an (N,1)-wide matvec.
    logits = jnp.sum(emb * transformed_global[:, None, :],
                     axis=-1, keepdims=True)          # (G, N, 1)
    scores = jax.nn.sigmoid(logits)                   # (G, N, 1)

    # representation (transposed) = sum_n scores * emb; the PyTorch mean over the
    # size-1 column dim is a no-op.
    out = jnp.sum(scores * emb, axis=1)               # (G, F)  weighted sublane reduce
    out_ref[...] = out.astype(out_ref.dtype)


def attention_module_batched(embeddings, weight_matrix, *, graphs_per_step=None):
    """embeddings: (B, N, F) -> (B, F); one attention readout per graph."""
    b, n, f = embeddings.shape
    assert weight_matrix.shape == (f, f)

    if graphs_per_step is None:
        # Prefer sublane-aligned blocks of 8 graphs while keeping >=2 grid steps
        # so both v7x TensorCores get work; otherwise do the whole batch at once.
        graphs_per_step = 8 if (b % 8 == 0 and b >= 16) else b
    g = graphs_per_step
    assert b % g == 0
    steps = b // g

    cost = pl.CostEstimate(
        flops=int(b * (2 * f * f + 6 * n * f)),
        transcendentals=int(b * (f + n)),
        bytes_accessed=int((b * n * f + f * f + b * f) * 4),
    )

    return pl.pallas_call(
        attention_kernel,
        out_shape=jax.ShapeDtypeStruct((b, f), jnp.float32),
        grid=(steps,),
        in_specs=[
            pl.BlockSpec((g, n, f), lambda i: (i, 0, 0)),
            pl.BlockSpec((f, f), lambda i: (0, 0)),
        ],
        out_specs=pl.BlockSpec((g, f), lambda i: (i, 0)),
        compiler_params=pltpu.CompilerParams(
            dimension_semantics=("parallel",),
            vmem_limit_bytes=16 * 1024 * 1024,
        ),
        cost_estimate=cost,
    )(embeddings, weight_matrix)


def attention_module(embedding, weight_matrix):
    """Single-graph entry point matching the PyTorch module: (N, F) -> (1, F)."""
    n, f = embedding.shape
    out = attention_module_batched(embedding.reshape(1, n, f), weight_matrix,
                                   graphs_per_step=1)
    return out.reshape(1, f)


def reference(embedding, weight_matrix):
    gc = jnp.mean(jnp.matmul(embedding, weight_matrix), axis=0)
    tg = jnp.tanh(gc)
    scores = jax.nn.sigmoid(jnp.matmul(embedding, tg.reshape(-1, 1)))
    rep = jnp.matmul(embedding.T, scores)
    return jnp.mean(rep, axis=1).reshape(1, -1)


if __name__ == "__main__":
    filters_3 = 32     # feature dim F
    num_nodes = 8      # N nodes per graph
    batch = 16         # B graphs processed in one pallas_call

    key = jax.random.PRNGKey(0)
    k_emb, k_w = jax.random.split(key)

    # Deterministic Xavier-uniform init for weight_matrix (F, F).
    bound = (6.0 / (filters_3 + filters_3)) ** 0.5
    weight_matrix = jax.random.uniform(
        k_w, (filters_3, filters_3), dtype=jnp.float32,
        minval=-bound, maxval=bound)

    embeddings = jax.random.normal(
        k_emb, (batch, num_nodes, filters_3), dtype=jnp.float32)

    # Batched kernel (the perf-relevant path).
    out_b = attention_module_batched(embeddings, weight_matrix)
    out_b = jax.block_until_ready(out_b)

    # Single-graph path, module-compatible (1, F) output.
    out_1 = attention_module(embeddings[0], weight_matrix)
    out_1 = jax.block_until_ready(out_1)

    ref_b = jax.vmap(lambda e: reference(e, weight_matrix)[0])(embeddings)
    ref_1 = reference(embeddings[0], weight_matrix)

    assert out_b.shape == (batch, filters_3)
    # Note: mean(emb@W) -> mean(emb)@W reorders fp accumulation; 1e-4 tol covers it.
    assert jnp.allclose(out_b, ref_b, atol=1e-4, rtol=1e-4)
    assert out_1.shape == (1, filters_3)
    assert jnp.allclose(out_1, ref_1, atol=1e-4, rtol=1e-4)

    print("KERNEL_OK")
</pallas_src>

<mosaic_0001>
module attributes {stable_mosaic.version = 11 : i64} {
  func.func @attention_kernel(%arg0: i32, %arg1: memref<8x8x32xf32, #tpu.memory_space<vmem>>, %arg2: memref<32x32xf32, #tpu.memory_space<vmem>>, %arg3: memref<8x32xf32, #tpu.memory_space<vmem>>) attributes {dimension_semantics = [#tpu.dimension_semantics<parallel>], iteration_bounds = array<i64: 2>, scalar_prefetch = 0 : i64, scratch_operands = 0 : i64, tpu.core_type = #tpu.core_type<tc>, window_params = [{transform_indices = @transform_0, window_bounds = array<i64: 8, 8, 32>}, {pipeline_mode = #tpu.pipeline_mode<synchronous>, transform_indices = @transform_1, window_bounds = array<i64: 32, 32>}, {transform_indices = @transform_2, window_bounds = array<i64: 8, 32>}]} {
    %c0 = arith.constant 0 : index
    %c0_0 = arith.constant 0 : index
    %c0_1 = arith.constant 0 : index
    %0 = vector.load %arg1[%c0, %c0_0, %c0_1] : memref<8x8x32xf32, #tpu.memory_space<vmem>>, vector<8x8x32xf32>
    %c0_2 = arith.constant 0 : index
    %c0_3 = arith.constant 0 : index
    %1 = vector.load %arg2[%c0_2, %c0_3] : memref<32x32xf32, #tpu.memory_space<vmem>>, vector<32x32xf32>
    %cst = arith.constant dense<0.000000e+00> : vector<8x32xf32>
    %2 = vector.multi_reduction <add>, %0, %cst [1] : vector<8x8x32xf32> to vector<8x32xf32>
    %cst_4 = arith.constant 1.250000e-01 : f32
    %3 = vector.broadcast %cst_4 : f32 to vector<8x32xf32>
    %4 = arith.mulf %2, %3 : vector<8x32xf32>
    %cst_5 = arith.constant dense<0.000000e+00> : vector<8x32xf32>
    %5 = tpu.matmul %4, %1, %cst_5 {dimension_numbers = #tpu.dot_dimension_numbers<[1], [0], [0], [1], [0, 0, 1, 1], [], []>} : vector<8x32xf32>, vector<32x32xf32>, vector<8x32xf32> -> vector<8x32xf32>
    %6 = math.tanh %5 : vector<8x32xf32>
    %7 = vector.shape_cast %6 : vector<8x32xf32> to vector<8x1x32xf32>
    %8 = vector.broadcast %7 : vector<8x1x32xf32> to vector<8x8x32xf32>
    %9 = arith.mulf %0, %8 : vector<8x8x32xf32>
    %cst_6 = arith.constant dense<0.000000e+00> : vector<8x8xf32>
    %10 = vector.multi_reduction <add>, %9, %cst_6 [2] : vector<8x8x32xf32> to vector<8x8xf32>
    %11 = vector.shape_cast %10 : vector<8x8xf32> to vector<8x8x1xf32>
    %12 = arith.negf %11 : vector<8x8x1xf32>
    %13 = math.exp %12 : vector<8x8x1xf32>
    %cst_7 = arith.constant 1.000000e+00 : f32
    %14 = vector.broadcast %cst_7 : f32 to vector<8x8x1xf32>
    %15 = arith.addf %14, %13 : vector<8x8x1xf32>
    %16 = arith.divf %14, %15 : vector<8x8x1xf32>
    %17 = vector.broadcast %16 : vector<8x8x1xf32> to vector<8x8x32xf32>
    %18 = arith.mulf %17, %0 : vector<8x8x32xf32>
    %cst_8 = arith.constant dense<0.000000e+00> : vector<8x32xf32>
    %19 = vector.multi_reduction <add>, %18, %cst_8 [1] : vector<8x8x32xf32> to vector<8x32xf32>
    %c0_9 = arith.constant 0 : index
    %c0_10 = arith.constant 0 : index
    %20 = vector.load %arg3[%c0_9, %c0_10] : memref<8x32xf32, #tpu.memory_space<vmem>>, vector<8x32xf32>
    tpu.vector_store %arg3[%c0_9, %c0_10], %19 {strides = array<i32>} : memref<8x32xf32, #tpu.memory_space<vmem>>, vector<8x32xf32>,
    return
  }
  func.func @transform_0(%arg0: i32) -> (i32, i32, i32) {
    %c0_i32 = arith.constant 0 : i32
    %c0_i32_0 = arith.constant 0 : i32
    %c0_i32_1 = arith.constant 0 : i32
    return %arg0, %c0_i32, %c0_i32_0 : i32, i32, i32
  }
  func.func @transform_1(%arg0: i32) -> (i32, i32) {
    %c0_i32 = arith.constant 0 : i32
    %c0_i32_0 = arith.constant 0 : i32
    %c0_i32_1 = arith.constant 0 : i32
    return %c0_i32, %c0_i32_0 : i32, i32
  }
  func.func @transform_2(%arg0: i32) -> (i32, i32) {
    %c0_i32 = arith.constant 0 : i32
    %c0_i32_0 = arith.constant 0 : i32
    return %arg0, %c0_i32 : i32, i32
  }
}

</mosaic_0001>

<llo_original>
// kernel: tpu_custom_call.1
$region0: #{tpu_custom_call.1}
  #allocation0 [shape = 'u32[]', space=smem, size = 0x4, offset = 0x4, fixed_abs, tag = 'smem constant byte address 0x4 - core index']
  #allocation1 [shape = 'u32[144,128]{1,0:T(1,128)}', space=vmem, size = 0x12000, scoped, tag = 'internal scratch']
  %s0 = inlined_call_operand.hbm [shape: f32[16,8,32], index: 0, kind: input, shape index: {}]
  %s1 = inlined_call_operand.hbm [shape: f32[32,32], index: 1, kind: input, shape index: {}]
  %s2 = inlined_call_operand.hbm [shape: f32[16,32], index: 2, kind: output, shape index: {}]
  %s3 = sld [smem:[#allocation0]]
  $region49: #{tpu_custom_call.1} parent=0
    _
  %s5 = ssub.s32 1, %s3
  %s6 = scalar_select 0, %s5, %s3
  $region1: #{tpu_custom_call.1} parent=0
    #allocation2 [shape = 'u8[65536]{0}', space=vmem, size = 0x10000, scoped, tag = 'input window, operand 0']
    #allocation3 [shape = 's32[2]{0}', space=sflag, size = 0x8, scoped, tag = 'scoped memory for tpu_custom_call.1']
    #allocation4 [shape = 's32[2]{0}', space=sflag, size = 0x8, scoped, tag = 'scoped memory for tpu_custom_call.1']
    #allocation5 [shape = 'u8[16384]{0}', space=vmem, size = 0x4000, scoped, tag = 'input window, operand 1, single buffered']
    #allocation6 [shape = 's32[1]{0}', space=sflag, size = 0x4, scoped, tag = 'scoped memory for tpu_custom_call.1']
    #allocation7 [shape = 'u8[8192]{0}', space=vmem, size = 0x2000, scoped, tag = 'output window, operand 0']
    %7 = vsyncpa [#allocation3], 0
    %s8 = scalar_lea.sflag [#allocation3], 1
    %9 = vsyncpa %s8, 0
    %10 = vsyncpa [#allocation6], 0
    %11 = vsyncpa [#allocation4], 0
    %s12 = scalar_lea.sflag [#allocation4], 1
    %13 = vsyncpa %s12, 0
    loop: start=0, step=1, limit=4
    $region2: #{tpu_custom_call.1} parent=1 // loop_pre_header
      _
    $region3: #{tpu_custom_call.1} parent=1 // loop_header
      %s15 = sphi 0, %s19
      %p16 = scmp.ge.s32.totalorder %s15, 4
      %s25 = sphi 0, %s27
      %s28 = sphi 0, %s25
      %s29 = sphi 0, %s28
      %s45 = sphi 0, %s29
      %s49 = sphi 0, %s49
      %s51 = sphi 0, %s49
      %s52 = sphi 0, %s51
      %s66 = sphi 0, %s52
      %s72 = sphi 0, %s74
      %s75 = sphi 0, %s72
      %s76 = sphi 0, %s75
      %s92 = sphi 0, %s76
    $region4: #{tpu_custom_call.1} parent=1 // loop_header_branch
      %18 = sbr.rel (%p16) target = $region8
    $region5: #{tpu_custom_call.1} parent=1 // loop_body
      %s20 = ssub.s32 %s15, 1
      %s21 = ssub.s32 %s15, 2
      %s22 = sadd.s32 %s15, 1
      %s23 = ssub.s32 %s15, %s22
      %p24 = scmp.eq.s32.totalorder %s23, 0
      %s26 = sadd.s32 %s25, 1
      %s27 = scalar_select %p24, %s25, %s26
      %p30 = pneg %p24
      %p31 = scmp.eq.s32.totalorder %s15, 1
      %p32 = por %p30, %p31
      %p33 = scmp.ne.s32.totalorder %s25, %s28
      %p34 = scmp.eq.s32.totalorder %s15, 0
      %p35 = por %p33, %p34
      %p36 = scmp.ne.s32.totalorder %s25, %s28
      %p37 = scmp.eq.s32.totalorder %s20, 1
      %p38 = por %p36, %p37
      %p39 = scmp.ne.s32.totalorder %s28, %s29
      %p40 = scmp.eq.s32.totalorder %s20, 0
      %p41 = por %p39, %p40
      %p42 = scmp.ne.s32.totalorder %s28, %s29
      %p43 = scmp.eq.s32.totalorder %s21, 1
      %p44 = por %p42, %p43
      %p46 = scmp.ne.s32.totalorder %s29, %s45
      %p47 = scmp.eq.s32.totalorder %s21, 0
      %p48 = por %p46, %p47
      %s50 = sadd.s32 %s49, 1
      %p53 = scmp.eq.s32.totalorder %s15, 1
      %p54 = scmp.ne.s32.totalorder %s49, %s51
      %p55 = scmp.eq.s32.totalorder %s15, 0
      %p56 = por %p54, %p55
      %p57 = scmp.ne.s32.totalorder %s49, %s51
      %p58 = scmp.eq.s32.totalorder %s20, 1
      %p59 = por %p57, %p58
      %p60 = scmp.ne.s32.totalorder %s51, %s52
      %p61 = scmp.eq.s32.totalorder %s20, 0
      %p62 = por %p60, %p61
      %p63 = scmp.ne.s32.totalorder %s51, %s52
      %p64 = scmp.eq.s32.totalorder %s21, 1
      %p65 = por %p63, %p64
      %p67 = scmp.ne.s32.totalorder %s52, %s66
      %p68 = scmp.eq.s32.totalorder %s21, 0
      %p69 = por %p67, %p68
      %s70 = ssub.s32 %s15, %s22
      %p71 = scmp.eq.s32.totalorder %s70, 0
      %s73 = sadd.s32 %s72, 1
      %s74 = scalar_select %p71, %s72, %s73
      %p77 = pneg %p71
      %p78 = scmp.eq.s32.totalorder %s15, 1
      %p79 = por %p77, %p78
      %p80 = scmp.ne.s32.totalorder %s72, %s75
      %p81 = scmp.eq.s32.totalorder %s15, 0
      %p82 = por %p80, %p81
      %p83 = scmp.ne.s32.totalorder %s72, %s75
      %p84 = scmp.eq.s32.totalorder %s20, 1
      %p85 = por %p83, %p84
      %p86 = scmp.ne.s32.totalorder %s75, %s76
      %p87 = scmp.eq.s32.totalorder %s20, 0
      %p88 = por %p86, %p87
      %p89 = scmp.ne.s32.totalorder %s75, %s76
      %p90 = scmp.eq.s32.totalorder %s21, 1
      %p91 = por %p89, %p90
      %p93 = scmp.ne.s32.totalorder %s76, %s92
      %p94 = scmp.eq.s32.totalorder %s21, 0
      %p95 = por %p93, %p94
      %p96 = scmp.le.s32.totalorder 1, %s15
      %p97 = scmp.lt.s32.totalorder %s15, 3
      %p98 = pnand %p96, %p97
      %p99 = pneg %p98
      // Predicated region
      $region9: #{tpu_custom_call.1} parent=5 // pred_check
        _
      $region10: #{tpu_custom_call.1} parent=5 // pred_check_branch
        %101 = sbr.rel (%p98) target = $region12
      $region11: #{tpu_custom_call.1} parent=5 // pred_region
        %s102 = ssub.s32 %s15, 1
        // Predicated region
        $region13: #{tpu_custom_call.1} parent=11 // pred_check
          %p103 = pneg %p62
        $region14: #{tpu_custom_call.1} parent=11 // pred_check_branch
          %105 = sbr.rel (%p103) target = $region16
        $region15: #{tpu_custom_call.1} parent=11 // pred_region
          %s107 = ssub.s32 512, 512
          %108 = vsyncadd [#allocation6], %s107
          %s109 = sshll.u32 [#allocation5], 4
          %s110 = int_to_ptr.vmem [resolvable:$true] %s109
          %115 = dma.hbm_to_vmem [thread:$0]  %s1, 512, %s110, [#allocation6], 128, 128, 8
        $region16: #{tpu_custom_call.1} parent=11 // pred_fallthru
          _
      $region12: #{tpu_custom_call.1} parent=5 // pred_fallthru
        _
      %p116 = scmp.lt.s32.totalorder %s15, 2
      // Predicated region
      $region17: #{tpu_custom_call.1} parent=5 // pred_check
        %p117 = pneg %p116
      $region18: #{tpu_custom_call.1} parent=5 // pred_check_branch
        %119 = sbr.rel (%p117) target = $region20
      $region19: #{tpu_custom_call.1} parent=5 // pred_region
        // Predicated region
        $region21: #{tpu_custom_call.1} parent=19 // pred_check
          %p120 = pneg %p35
        $region22: #{tpu_custom_call.1} parent=19 // pred_check_branch
          %122 = sbr.rel (%p120) target = $region24
        $region23: #{tpu_custom_call.1} parent=19 // pred_region
          %s123 = sand.u32 %s25, 1
          %s124 = scalar_lea.sflag [#allocation3], %s123
          %s125 = sand.u32 %s25, 1
          %s126 = smul.addr %s125, 64
          %s127 = scalar_lea.vmem [#allocation2], %s126
          %s128 = smul.u32 8, %s15
          %s130 = ssub.s32 1024, 1024
          %131 = vsyncadd %s124, %s130
          %s132 = smul.addr %s128, 128
          %s133 = scalar_lea.hbm %s0, %s132
          %s134 = sshll.u32 %s127, 4
          %s135 = int_to_ptr.vmem [resolvable:$true] %s134
          %140 = dma.hbm_to_vmem [thread:$0]  %s133, 1024, %s135, %s124, 128, 128, 8
        $region24: #{tpu_custom_call.1} parent=19 // pred_fallthru
          _
      $region20: #{tpu_custom_call.1} parent=5 // pred_fallthru
        _
      %p141 = scmp.le.s32.totalorder 1, %s15
      %p142 = scmp.lt.s32.totalorder %s15, 3
      %p143 = pnand %p141, %p142
      %p144 = pneg %p143
      // Predicated region
      $region25: #{tpu_custom_call.1} parent=5 // pred_check
        _
      $region26: #{tpu_custom_call.1} parent=5 // pred_check_branch
        %146 = sbr.rel (%p143) target = $region28
      $region27: #{tpu_custom_call.1} parent=5 // pred_region
        %s147 = ssub.s32 %s15, 1
        %s148 = sand.u32 %s28, 1
        %s149 = scalar_lea.sflag [#allocation3], %s148
        %s150 = sand.u32 %s28, 1
        %s151 = smul.addr %s150, 64
        %s152 = scalar_lea.vmem [#allocation2], %s151
        // Predicated region
        $region29: #{tpu_custom_call.1} parent=27 // pred_check
          %p153 = pneg %p41
        $region30: #{tpu_custom_call.1} parent=27 // pred_check_branch
          %155 = sbr.rel (%p153) target = $region32
        $region31: #{tpu_custom_call.1} parent=27 // pred_region
          %156 = dma.done %s149, 1024
        $region32: #{tpu_custom_call.1} parent=27 // pred_fallthru
          _
        // Predicated region
        $region33: #{tpu_custom_call.1} parent=27 // pred_check
          %p157 = pneg %p62
        $region34: #{tpu_custom_call.1} parent=27 // pred_check_branch
          %159 = sbr.rel (%p157) target = $region36
        $region35: #{tpu_custom_call.1} parent=27 // pred_region
          %160 = dma.done [#allocation6], 512
        $region36: #{tpu_custom_call.1} parent=27 // pred_fallthru
          _
        %s161 = sand.u32 %s28, 1
        %s162 = scalar_lea.sflag [#allocation3], %s161
        %s163 = sand.u32 %s28, 1
        %s164 = smul.addr %s163, 64
        %s165 = scalar_lea.vmem [#allocation2], %s164
        %p166 = pneg %p41
        %p167 = pneg %p38
        %p168 = pneg %p62
        %p169 = pneg %p59
        %p170 = pneg %p88
        %p171 = pneg %p85
        %s172 = sand.u32 %s75, 1
        %s173 = scalar_lea.sflag [#allocation4], %s172
        %s174 = sand.u32 %s75, 1
        %s175 = smul.addr %s174, 8
        %s176 = scalar_lea.vmem [#allocation7], %s175
        %s177 = smul.u32 8, %s20
        %v178 = vld [vmem:[%s152] sm:$0xff]
        %v179 = vld [vmem:[%s152 + $0x8] sm:$0xff]
        %v180 = vld [vmem:[%s152 + $0x10] sm:$0xff]
        %v181 = vld [vmem:[%s152 + $0x18] sm:$0xff]
        %v182 = vld [vmem:[%s152 + $0x20] sm:$0xff]
        %v183 = vld [vmem:[%s152 + $0x28] sm:$0xff]
        %v184 = vld [vmem:[%s152 + $0x30] sm:$0xff]
        %v185 = vld [vmem:[%s152 + $0x38] sm:$0xff]
        %v186 = vld [vmem:[#allocation5] sm:$0xff]
        %v187 = vld [vmem:[#allocation5 + $0x8] sm:$0xff]
        %v188 = vld [vmem:[#allocation5 + $0x10] sm:$0xff]
        %v189 = vld [vmem:[#allocation5 + $0x18] sm:$0xff]
        %vm190 = vcmask 261120
        %v191 = vsel %vm190, %v178, 0.0
        %v192 = vrot.slane %v191, 4
        %v193 = vadd.f32 %v191, %v192
        %v194 = vrot.slane %v193, 2
        %v195 = vadd.f32 %v193, %v194
        %v196 = vrot.slane %v195, 1
        %v197 = vadd.f32 %v195, %v196
        %v198 = vsel %vm190, %v179, 0.0
        %v199 = vrot.slane %v198, 4
        %v200 = vadd.f32 %v198, %v199
        %v201 = vrot.slane %v200, 2
        %v202 = vadd.f32 %v200, %v201
        %v203 = vrot.slane %v202, 1
        %v204 = vadd.f32 %v202, %v203
        %v205 = vsel %vm190, %v180, 0.0
        %v206 = vrot.slane %v205, 4
        %v207 = vadd.f32 %v205, %v206
        %v208 = vrot.slane %v207, 2
        %v209 = vadd.f32 %v207, %v208
        %v210 = vrot.slane %v209, 1
        %v211 = vadd.f32 %v209, %v210
        %v212 = vsel %vm190, %v181, 0.0
        %v213 = vrot.slane %v212, 4
        %v214 = vadd.f32 %v212, %v213
        %v215 = vrot.slane %v214, 2
        %v216 = vadd.f32 %v214, %v215
        %v217 = vrot.slane %v216, 1
        %v218 = vadd.f32 %v216, %v217
        %v219 = vsel %vm190, %v182, 0.0
        %v220 = vrot.slane %v219, 4
        %v221 = vadd.f32 %v219, %v220
        %v222 = vrot.slane %v221, 2
        %v223 = vadd.f32 %v221, %v222
        %v224 = vrot.slane %v223, 1
        %v225 = vadd.f32 %v223, %v224
        %v226 = vsel %vm190, %v183, 0.0
        %v227 = vrot.slane %v226, 4
        %v228 = vadd.f32 %v226, %v227
        %v229 = vrot.slane %v228, 2
        %v230 = vadd.f32 %v228, %v229
        %v231 = vrot.slane %v230, 1
        %v232 = vadd.f32 %v230, %v231
        %v233 = vsel %vm190, %v184, 0.0
        %v234 = vrot.slane %v233, 4
        %v235 = vadd.f32 %v233, %v234
        %v236 = vrot.slane %v235, 2
        %v237 = vadd.f32 %v235, %v236
        %v238 = vrot.slane %v237, 1
        %v239 = vadd.f32 %v237, %v238
        %v240 = vsel %vm190, %v185, 0.0
        %v241 = vrot.slane %v240, 4
        %v242 = vadd.f32 %v240, %v241
        %v243 = vrot.slane %v242, 2
        %v244 = vadd.f32 %v242, %v243
        %v245 = vrot.slane %v244, 1
        %v246 = vadd.f32 %v244, %v245
        %v247 = vmul.f32 %v197, 0.125
        %v248 = vmul.f32 %v204, 0.125
        %v249 = vmul.f32 %v211, 0.125
        %v250 = vmul.f32 %v218, 0.125
        %v251 = vmul.f32 %v225, 0.125
        %v252 = vmul.f32 %v232, 0.125
        %v253 = vmul.f32 %v239, 0.125
        %v254 = vmul.f32 %v246, 0.125
        %vm263 = vcmask 1041409
        %v264 = vsel %vm263, %v248, %v247
        %vm265 = vcmask 1042434
        %v266 = vsel %vm265, %v249, %v264
        %vm267 = vcmask 1043459
        %v268 = vsel %vm267, %v250, %v266
        %vm269 = vcmask 1044484
        %v270 = vsel %vm269, %v251, %v268
        %vm271 = vcmask 1045509
        %v272 = vsel %vm271, %v252, %v270
        %vm273 = vcmask 1046534
        %v274 = vsel %vm273, %v253, %v272
        %vm275 = vcmask 1047559
        %v276 = vsel %vm275, %v254, %v274
        %v277 = vsel %vm190, %v276, 0
        %279 = vmatprep.subr.mxu0 0.0
        %280 = vmatpush1.msra.mxu0 %v186
        %281 = vmatprep.subr.mxu0 0.0
        %282 = vmatpush1.msra.mxu0 %v187
        %283 = vmatprep.subr.mxu0 0.0
        %284 = vmatpush1.msra.mxu0 %v188
        %285 = vmatprep.subr.mxu0 0.0
        %286 = vmatpush1.msra.mxu0 %v189
        %287 = vmatprep.subr.mxu0 0.0
        %288 = vmatpush1.msra.mxu0 0.0
        %289 = vmatprep.subr.mxu0 0.0
        %290 = vmatpush1.msra.mxu0 0.0
        %291 = vmatprep.subr.mxu0 0.0
        %292 = vmatpush1.msra.mxu0 0.0
        %293 = vmatprep.subr.mxu0 0.0
        %294 = vmatpush1.msra.mxu0 0.0
        %295 = vmatprep.subr.mxu0 0.0
        %296 = vmatpush1.msra.mxu0 0.0
        %297 = vmatprep.subr.mxu0 0.0
        %298 = vmatpush1.msra.mxu0 0.0
        %299 = vmatprep.subr.mxu0 0.0
        %300 = vmatpush1.msra.mxu0 0.0
        %301 = vmatprep.subr.mxu0 0.0
        %302 = vmatpush1.msra.mxu0 0.0
        %303 = vmatprep.subr.mxu0 0.0
        %304 = vmatpush1.msra.mxu0 0.0
        %305 = vmatprep.subr.mxu0 0.0
        %306 = vmatpush1.msra.mxu0 0.0
        %307 = vmatprep.subr.mxu0 0.0
        %308 = vmatpush1.msra.mxu0 0.0
        %309 = vmatprep.subr.mxu0 0.0
        %310 = vmatpush1.msra.mxu0 0.0
        %311 = vmatprep.subr.mxu0 0.0
        %312 = vmatpush1.msra.mxu0 0.0
        %313 = vmatprep.subr.mxu0 0.0
        %314 = vmatpush1.msra.mxu0 0.0
        %315 = vmatprep.subr.mxu0 0.0
        %316 = vmatpush1.msra.mxu0 0.0
        %317 = vmatprep.subr.mxu0 0.0
        %318 = vmatpush1.msra.mxu0 0.0
        %319 = vmatprep.subr.mxu0 0.0
        %320 = vmatpush1.msra.mxu0 0.0
        %321 = vmatprep.subr.mxu0 0.0
        %322 = vmatpush1.msra.mxu0 0.0
        %323 = vmatprep.subr.mxu0 0.0
        %324 = vmatpush1.msra.mxu0 0.0
        %325 = vmatprep.subr.mxu0 0.0
        %326 = vmatpush1.msra.mxu0 0.0
        %327 = vmatprep.subr.mxu0 0.0
        %328 = vmatpush1.msra.mxu0 0.0
        %329 = vmatprep.subr.mxu0 0.0
        %330 = vmatpush1.msra.mxu0 0.0
        %331 = vmatprep.subr.mxu0 0.0
        %332 = vmatpush1.msra.mxu0 0.0
        %333 = vmatprep.subr.mxu0 0.0
        %334 = vmatpush1.msra.mxu0 0.0
        %335 = vmatprep.subr.mxu0 0.0
        %336 = vmatpush1.msra.mxu0 0.0
        %337 = vmatprep.subr.mxu0 0.0
        %338 = vmatpush1.msra.mxu0 0.0
        %339 = vmatprep.subr.mxu0 0.0
        %340 = vmatpush1.msra.mxu0 0.0
        %341 = vmatprep.subr.mxu0 0.0
        %342 = vmatpush1.msra.mxu0 0.0
        %343 = vmatprep.mubr.f32.mxu0 0.0
        %344 = vmatmul.mubr.f32.gmra.mrb[0].mxu0 %v277
        %v345 = vpop.f32.mrb[0].mxu0
        %v346 = vadd.f32 0.0, %v345
        %v347 = vpop.f32.mrb[0].mxu0
        %348 = vdwg.mxu0
        %v349 = vtanh.pop %v346
        %v351 = vcombine.high %v349, %v349
        %v353 = vunpack.c.l.s4 1966171168
        %v354 = vunpack.c.0.s8 %v353
        %v355 = vlaneseq
        %v356 = vshrl.u32 %v355, 7
        %v357 = vsub.s32 %v354, %v356
        %v358 = vrot.slane %v349, %v357
        %v360 = vunpack.c.l.s4 1966171168
        %v361 = vunpack.c.0.s8 %v360
        %v362 = vlaneseq
        %v363 = vshrl.u32 %v362, 7
        %v364 = vsub.s32 %v361, %v363
        %v365 = vrot.slane %v351, %v364
        %v366 = vcombine.high %v358, %v358
        %v367 = vcombine.high %v365, %v365
        %v369 = vunpack.c.l.s4 1966171168
        %v370 = vunpack.c.0.s8 %v369
        %v371 = vlaneseq
        %v372 = vshrl.u32 %v371, 7
        %v373 = vsub.s32 %v370, %v372
        %v374 = vrot.slane %v358, %v373
        %v376 = vunpack.c.l.s4 1966171168
        %v377 = vunpack.c.0.s8 %v376
        %v378 = vlaneseq
        %v379 = vshrl.u32 %v378, 7
        %v380 = vsub.s32 %v377, %v379
        %v381 = vrot.slane %v365, %v380
        %v383 = vunpack.c.l.s4 1966171168
        %v384 = vunpack.c.0.s8 %v383
        %v385 = vlaneseq
        %v386 = vshrl.u32 %v385, 7
        %v387 = vsub.s32 %v384, %v386
        %v388 = vrot.slane %v366, %v387
        %v390 = vunpack.c.l.s4 1966171168
        %v391 = vunpack.c.0.s8 %v390
        %v392 = vlaneseq
        %v393 = vshrl.u32 %v392, 7
        %v394 = vsub.s32 %v391, %v393
        %v395 = vrot.slane %v367, %v394
        %v396 = vcombine.high %v374, %v374
        %v397 = vcombine.high %v381, %v381
        %v398 = vcombine.high %v388, %v388
        %v399 = vcombine.high %v395, %v395
        %v400 = vlaneseq
        %v401 = vshrl.u32 %v400, 7
        %v402 = vsub.s32 0, %v401
        %v403 = vrot.slane %v374, %v402
        %v404 = vlaneseq
        %v405 = vshrl.u32 %v404, 7
        %v406 = vsub.s32 0, %v405
        %v407 = vrot.slane %v388, %v406
        %v408 = vlaneseq
        %v409 = vshrl.u32 %v408, 7
        %v410 = vsub.s32 0, %v409
        %v411 = vrot.slane %v396, %v410
        %v412 = vlaneseq
        %v413 = vshrl.u32 %v412, 7
        %v414 = vsub.s32 0, %v413
        %v415 = vrot.slane %v398, %v414
        %v416 = vlaneseq
        %v417 = vshrl.u32 %v416, 7
        %v418 = vsub.s32 0, %v417
        %v419 = vrot.slane %v381, %v418
        %v420 = vlaneseq
        %v421 = vshrl.u32 %v420, 7
        %v422 = vsub.s32 0, %v421
        %v423 = vrot.slane %v395, %v422
        %v424 = vlaneseq
        %v425 = vshrl.u32 %v424, 7
        %v426 = vsub.s32 0, %v425
        %v427 = vrot.slane %v397, %v426
        %v428 = vlaneseq
        %v429 = vshrl.u32 %v428, 7
        %v430 = vsub.s32 0, %v429
        %v431 = vrot.slane %v399, %v430
        %v440 = vmul.f32 %v178, %v403
        %v441 = vmul.f32 %v179, %v407
        %v442 = vmul.f32 %v180, %v411
        %v443 = vmul.f32 %v181, %v415
        %v444 = vmul.f32 %v182, %v419
        %v445 = vmul.f32 %v183, %v423
        %v446 = vmul.f32 %v184, %v427
        %v447 = vmul.f32 %v185, %v431
        %v448 = vsel %vm190, %v440, 0.0
        %449 = vadd.xlane.f32.xlu0 %v448
        %v450 = vpop.xlane.xlu0 %449
        %v451 = vsel %vm190, %v441, 0.0
        %452 = vadd.xlane.f32.xlu0 %v451
        %v453 = vpop.xlane.xlu0 %452
        %v454 = vsel %vm190, %v442, 0.0
        %455 = vadd.xlane.f32.xlu0 %v454
        %v456 = vpop.xlane.xlu0 %455
        %v457 = vsel %vm190, %v443, 0.0
        %458 = vadd.xlane.f32.xlu0 %v457
        %v459 = vpop.xlane.xlu0 %458
        %v460 = vsel %vm190, %v444, 0.0
        %461 = vadd.xlane.f32.xlu0 %v460
        %v462 = vpop.xlane.xlu0 %461
        %v463 = vsel %vm190, %v445, 0.0
        %464 = vadd.xlane.f32.xlu0 %v463
        %v465 = vpop.xlane.xlu0 %464
        %v466 = vsel %vm190, %v446, 0.0
        %467 = vadd.xlane.f32.xlu0 %v466
        %v468 = vpop.xlane.xlu0 %467
        %v469 = vsel %vm190, %v447, 0.0
        %470 = vadd.xlane.f32.xlu0 %v469
        %v471 = vpop.xlane.xlu0 %470
        %v472 = vxor.u32 %v450, 2147483648
        %v473 = vxor.u32 %v453, 2147483648
        %v474 = vxor.u32 %v456, 2147483648
        %v475 = vxor.u32 %v459, 2147483648
        %v476 = vxor.u32 %v462, 2147483648
        %v477 = vxor.u32 %v465, 2147483648
        %v478 = vxor.u32 %v468, 2147483648
        %v479 = vxor.u32 %v471, 2147483648
        %v480 = vmul.f32 %v472, 1.442695
        %v481 = vpow.pop %v480
        %v482 = vmul.f32 %v473, 1.442695
        %v483 = vpow.pop %v482
        %v484 = vmul.f32 %v474, 1.442695
        %v485 = vpow.pop %v484
        %v486 = vmul.f32 %v475, 1.442695
        %v487 = vpow.pop %v486
        %v488 = vmul.f32 %v476, 1.442695
        %v489 = vpow.pop %v488
        %v490 = vmul.f32 %v477, 1.442695
        %v491 = vpow.pop %v490
        %v492 = vmul.f32 %v478, 1.442695
        %v493 = vpow.pop %v492
        %v494 = vmul.f32 %v479, 1.442695
        %v495 = vpow.pop %v494
        %v496 = vadd.f32 %v481, 1.0
        %v497 = vadd.f32 %v483, 1.0
        %v498 = vadd.f32 %v485, 1.0
        %v499 = vadd.f32 %v487, 1.0
        %v500 = vadd.f32 %v489, 1.0
        %v501 = vadd.f32 %v491, 1.0
        %v502 = vadd.f32 %v493, 1.0
        %v503 = vadd.f32 %v495, 1.0
        %v504 = vrcp.pop %v496
        %v505 = vmul.f32 1.0, %v504
        %v506 = vrcp.pop %v497
        %v507 = vmul.f32 1.0, %v506
        %v508 = vrcp.pop %v498
        %v509 = vmul.f32 1.0, %v508
        %v510 = vrcp.pop %v499
        %v511 = vmul.f32 1.0, %v510
        %v512 = vrcp.pop %v500
        %v513 = vmul.f32 1.0, %v512
        %v514 = vrcp.pop %v501
        %v515 = vmul.f32 1.0, %v514
        %v516 = vrcp.pop %v502
        %v517 = vmul.f32 1.0, %v516
        %v518 = vrcp.pop %v503
        %v519 = vmul.f32 1.0, %v518
        %v520 = vmul.f32 %v505, %v178
        %v521 = vmul.f32 %v507, %v179
        %v522 = vmul.f32 %v509, %v180
        %v523 = vmul.f32 %v511, %v181
        %v524 = vmul.f32 %v513, %v182
        %v525 = vmul.f32 %v515, %v183
        %v526 = vmul.f32 %v517, %v184
        %v527 = vmul.f32 %v519, %v185
        %v528 = vsel %vm190, %v520, 0.0
        %v529 = vrot.slane %v528, 4
        %v530 = vadd.f32 %v528, %v529
        %v531 = vrot.slane %v530, 2
        %v532 = vadd.f32 %v530, %v531
        %v533 = vrot.slane %v532, 1
        %v534 = vadd.f32 %v532, %v533
        %v535 = vsel %vm190, %v521, 0.0
        %v536 = vrot.slane %v535, 4
        %v537 = vadd.f32 %v535, %v536
        %v538 = vrot.slane %v537, 2
        %v539 = vadd.f32 %v537, %v538
        %v540 = vrot.slane %v539, 1
        %v541 = vadd.f32 %v539, %v540
        %v542 = vsel %vm190, %v522, 0.0
        %v543 = vrot.slane %v542, 4
        %v544 = vadd.f32 %v542, %v543
        %v545 = vrot.slane %v544, 2
        %v546 = vadd.f32 %v544, %v545
        %v547 = vrot.slane %v546, 1
        %v548 = vadd.f32 %v546, %v547
        %v549 = vsel %vm190, %v523, 0.0
        %v550 = vrot.slane %v549, 4
        %v551 = vadd.f32 %v549, %v550
        %v552 = vrot.slane %v551, 2
        %v553 = vadd.f32 %v551, %v552
        %v554 = vrot.slane %v553, 1
        %v555 = vadd.f32 %v553, %v554
        %v556 = vsel %vm190, %v524, 0.0
        %v557 = vrot.slane %v556, 4
        %v558 = vadd.f32 %v556, %v557
        %v559 = vrot.slane %v558, 2
        %v560 = vadd.f32 %v558, %v559
        %v561 = vrot.slane %v560, 1
        %v562 = vadd.f32 %v560, %v561
        %v563 = vsel %vm190, %v525, 0.0
        %v564 = vrot.slane %v563, 4
        %v565 = vadd.f32 %v563, %v564
        %v566 = vrot.slane %v565, 2
        %v567 = vadd.f32 %v565, %v566
        %v568 = vrot.slane %v567, 1
        %v569 = vadd.f32 %v567, %v568
        %v570 = vsel %vm190, %v526, 0.0
        %v571 = vrot.slane %v570, 4
        %v572 = vadd.f32 %v570, %v571
        %v573 = vrot.slane %v572, 2
        %v574 = vadd.f32 %v572, %v573
        %v575 = vrot.slane %v574, 1
        %v576 = vadd.f32 %v574, %v575
        %v577 = vsel %vm190, %v527, 0.0
        %v578 = vrot.slane %v577, 4
        %v579 = vadd.f32 %v577, %v578
        %v580 = vrot.slane %v579, 2
        %v581 = vadd.f32 %v579, %v580
        %v582 = vrot.slane %v581, 1
        %v583 = vadd.f32 %v581, %v582
        %v592 = vsel %vm263, %v541, %v534
        %v593 = vsel %vm265, %v548, %v592
        %v594 = vsel %vm267, %v555, %v593
        %v595 = vsel %vm269, %v562, %v594
        %v596 = vsel %vm271, %v569, %v595
        %v597 = vsel %vm273, %v576, %v596
        %v598 = vsel %vm275, %v583, %v597
        %600 = vst.msk [vmem:[%s176] sm:$0xff] %vm190, %v598
        %s601 = sand.u32 %s75, 1
        %s602 = scalar_lea.sflag [#allocation4], %s601
        %s603 = sand.u32 %s75, 1
        %s604 = smul.addr %s603, 8
        %s605 = scalar_lea.vmem [#allocation7], %s604
        // Predicated region
        $region37: #{tpu_custom_call.1} parent=27 // pred_check
          %p606 = pneg %p85
        $region38: #{tpu_custom_call.1} parent=27 // pred_check_branch
          %608 = sbr.rel (%p606) target = $region40
        $region39: #{tpu_custom_call.1} parent=27 // pred_region
          %s610 = ssub.s32 128, 128
          %611 = vsyncadd %s602, %s610
          %s612 = smul.addr %s20, 128
          %s613 = scalar_lea.hbm %s2, %s612
          %s615 = sshll.u32 %s605, 4
          %s616 = int_to_ptr.vmem [resolvable:$true] %s615
          %618 = dma.vmem_to_hbm [thread:$0]  %s616, 128, %s613, %s602
        $region40: #{tpu_custom_call.1} parent=27 // pred_fallthru
          _
      $region28: #{tpu_custom_call.1} parent=5 // pred_fallthru
        _
      %p619 = scmp.le.s32.totalorder 2, %s15
      // Predicated region
      $region41: #{tpu_custom_call.1} parent=5 // pred_check
        %p620 = pneg %p619
      $region42: #{tpu_custom_call.1} parent=5 // pred_check_branch
        %622 = sbr.rel (%p620) target = $region44
      $region43: #{tpu_custom_call.1} parent=5 // pred_region
        %s623 = ssub.s32 %s15, 2
        // Predicated region
        $region45: #{tpu_custom_call.1} parent=43 // pred_check
          %p624 = pneg %p91
        $region46: #{tpu_custom_call.1} parent=43 // pred_check_branch
          %626 = sbr.rel (%p624) target = $region48
        $region47: #{tpu_custom_call.1} parent=43 // pred_region
          %s627 = sand.u32 %s76, 1
          %s628 = scalar_lea.sflag [#allocation4], %s627
          %s629 = sand.u32 %s76, 1
          %s630 = smul.addr %s629, 8
          %s631 = scalar_lea.vmem [#allocation7], %s630
          %632 = dma.done %s628, 128
        $region48: #{tpu_custom_call.1} parent=43 // pred_fallthru
          _
      $region44: #{tpu_custom_call.1} parent=5 // pred_fallthru
        _
    $region6: #{tpu_custom_call.1} parent=1 // loop_footer
      %s19 = sadd.s32 1, %s15
    $region7: #{tpu_custom_call.1} parent=1 // loop_footer_branch
      %14 = sbr.rel target = $region3
    $region8: #{tpu_custom_call.1} parent=1 // loop_exit
      _
    %633 = vsyncpa [#allocation3], 1
    %s634 = scalar_lea.sflag [#allocation3], 1
    %635 = vsyncpa %s634, 1
    %636 = vsyncpa [#allocation6], 1
    %637 = vsyncpa [#allocation4], 1
    %s638 = scalar_lea.sflag [#allocation4], 1
    %639 = vsyncpa %s638, 1

</llo_original>
